<compile_context>
chip_gen: v7x
topology: tpu7x:2x2x1
jax: 0.10.0
libtpu: 0.0.40
codegen_flags: <defaults>
</compile_context>

<pallas_src>
import math

import jax
import jax.numpy as jnp
from jax.experimental import pallas as pl
from jax.experimental.pallas import tpu as pltpu

LANE = 128


def _make_kernel(tile_r, inner, odim):
    """Builds the masked-reduction kernel for a given tiling (closure consts)."""

    def kernel(olens_ref, after_ref, before_ref, ys_ref, out_ref, l1_acc, l2_acc):
        p = pl.program_id(0)          # parallel split of the row-tile axis
        b = pl.program_id(1)          # batch
        l = pl.program_id(2)          # reduction step within this split

        # Zero the per-(p, b) accumulators at the start of the reduction.
        @pl.when(l == 0)
        def _():
            l1_acc[...] = jnp.zeros_like(l1_acc)
            l2_acc[...] = jnp.zeros_like(l2_acc)

        ys = ys_ref[...].astype(jnp.float32)       # (1, tile_r, 128)
        after = after_ref[...].astype(jnp.float32)
        before = before_ref[...].astype(jnp.float32)

        # Logical (unclamped) row-tile index.  For overshoot / partial tiles the
        # flat index exceeds Lmax*odim >= olens[b]*odim, so the mask zeroes them
        # (jnp.where, not multiply, so garbage / NaN in padding cannot leak).
        r_blk = p * inner + l
        row = jax.lax.broadcasted_iota(jnp.int32, (1, tile_r, LANE), 1)
        lane = jax.lax.broadcasted_iota(jnp.int32, (1, tile_r, LANE), 2)
        flat = (r_blk * tile_r + row) * LANE + lane
        valid = flat < olens_ref[b] * odim          # prefix of the flat row

        d_a = jnp.where(valid, after - ys, 0.0)
        d_b = jnp.where(valid, before - ys, 0.0)

        # Reduce over the sublane (row) axis only; keep lanes (no cross-lane op).
        l1_acc[...] += jnp.sum(jnp.abs(d_a) + jnp.abs(d_b), axis=1)   # (1, 128)
        l2_acc[...] += jnp.sum(d_a * d_a + d_b * d_b, axis=1)         # (1, 128)

        # Single write of the resident output block at the end of the reduction.
        @pl.when(l == pl.num_programs(2) - 1)
        def _():
            out_ref[...] = jnp.concatenate(
                [l1_acc[...], l2_acc[...]], axis=0)[None, None]        # (1,1,2,128)

    return kernel


def transformer_loss_forward(after_outs, before_outs, ys, olens):
    """after_outs/before_outs/ys: (B, Lmax, odim); olens: (B,) int.

    Returns (l1_loss, mse_loss) scalars (float32), matching
    TransformerLoss(use_masking=True, use_weighted_masking=False).
    """
    B, Lmax, odim = ys.shape
    olens = olens.astype(jnp.int32)

    # --- Lane-dense layout: (B, Lmax, odim) -> (B, R, 128) with R*128 = L_pad*odim.
    # The reshape of contiguous rows is free; the jnp.pad is only triggered when
    # Lmax is not a multiple of 128/gcd(odim,128) (8 frames for odim=80).
    step = LANE // math.gcd(odim, LANE)
    L_pad = ((Lmax + step - 1) // step) * step
    if L_pad != Lmax:
        pad = [(0, 0), (0, L_pad - Lmax), (0, 0)]
        after_outs = jnp.pad(after_outs, pad)
        before_outs = jnp.pad(before_outs, pad)
        ys = jnp.pad(ys, pad)
    R = L_pad * odim // LANE
    after_f = after_outs.reshape(B, R, LANE)
    before_f = before_outs.reshape(B, R, LANE)
    ys_f = ys.reshape(B, R, LANE)

    # --- Tiling: ~2 MiB per input block (4096 * 128 * 4B); whole row axis if small.
    TILE_R = R if R <= 4096 else 4096
    r_tiles = pl.cdiv(R, TILE_R)
    # Outer parallel split so both v7x TensorCores have work even when B == 1.
    P = 2 if r_tiles >= 2 else 1
    inner = pl.cdiv(r_tiles, P)

    def in_map(p, b, l, olens_s):
        # Clamp overshoot block indices (only when P*inner > r_tiles) onto the
        # last real block; their contribution is zeroed by the in-kernel mask.
        return (b, jnp.minimum(p * inner + l, r_tiles - 1), 0)

    in_spec = pl.BlockSpec((1, TILE_R, LANE), in_map)

    elem_bytes = jnp.dtype(ys_f.dtype).itemsize
    bytes_accessed = 3 * B * R * LANE * elem_bytes + P * B * 2 * LANE * 4

    partial = pl.pallas_call(
        _make_kernel(TILE_R, inner, odim),
        out_shape=jax.ShapeDtypeStruct((P, B, 2, LANE), jnp.float32),
        grid_spec=pltpu.PrefetchScalarGridSpec(
            num_scalar_prefetch=1,                # olens -> SMEM
            grid=(P, B, inner),                   # reduction axis last
            in_specs=[in_spec, in_spec, in_spec],
            out_specs=pl.BlockSpec((1, 1, 2, LANE),
                                   lambda p, b, l, olens_s: (p, b, 0, 0)),
            scratch_shapes=[pltpu.VMEM((1, LANE), jnp.float32),
                            pltpu.VMEM((1, LANE), jnp.float32)],
        ),
        compiler_params=pltpu.CompilerParams(
            dimension_semantics=("parallel", "parallel", "arbitrary"),
            vmem_limit_bytes=32 * 1024 * 1024),
        cost_estimate=pl.CostEstimate(
            flops=10 * B * L_pad * odim,
            transcendentals=0,
            bytes_accessed=bytes_accessed),
    )(olens, after_f, before_f, ys_f)

    # Tiny final reduction + mean normalization outside the kernel.
    sums = jnp.sum(partial, axis=(0, 1, 3))                    # (2,)
    count = (jnp.sum(olens) * odim).astype(jnp.float32)        # masked element count
    l1_loss = sums[0] / count
    mse_loss = sums[1] / count
    return l1_loss, mse_loss


def _reference_forward(after_outs, before_outs, ys, olens):
    B, Lmax, odim = ys.shape
    mask = (jnp.arange(Lmax)[None, :] < olens[:, None])[..., None]   # (B, Lmax, 1)
    d_a = jnp.where(mask, after_outs - ys, 0.0)
    d_b = jnp.where(mask, before_outs - ys, 0.0)
    count = (jnp.sum(olens) * odim).astype(jnp.float32)
    l1 = (jnp.sum(jnp.abs(d_a)) + jnp.sum(jnp.abs(d_b))) / count
    mse = (jnp.sum(d_a * d_a) + jnp.sum(d_b * d_b)) / count
    return l1, mse


if __name__ == "__main__":
    # Small shapes consistent with the module: B=2, Lmax=16, odim=80 (mel dim).
    B, Lmax, odim = 2, 16, 80

    key = jax.random.PRNGKey(0)
    k1, k2, k3 = jax.random.split(key, 3)

    ys = jax.random.normal(k1, (B, Lmax, odim), dtype=jnp.float32)
    after_outs = ys + 0.1 * jax.random.normal(k2, (B, Lmax, odim), dtype=jnp.float32)
    before_outs = ys + 0.2 * jax.random.normal(k3, (B, Lmax, odim), dtype=jnp.float32)
    olens = jnp.array([11, 16], dtype=jnp.int32)   # includes padded positions

    l1_loss, mse_loss = transformer_loss_forward(after_outs, before_outs, ys, olens)
    l1_loss = jax.block_until_ready(l1_loss)
    mse_loss = jax.block_until_ready(mse_loss)

    l1_ref, mse_ref = _reference_forward(after_outs, before_outs, ys, olens)
    assert l1_loss.shape == () and mse_loss.shape == ()
    assert jnp.allclose(l1_loss, l1_ref, atol=1e-5, rtol=1e-5)
    assert jnp.allclose(mse_loss, mse_ref, atol=1e-5, rtol=1e-5)

    print("KERNEL_OK")
</pallas_src>

<mosaic_0001>
module attributes {stable_mosaic.version = 11 : i64} {
  func.func @kernel(%arg0: i32, %arg1: i32, %arg2: i32, %arg3: memref<2xi32, #tpu.memory_space<smem>>, %arg4: memref<1x10x128xf32, #tpu.memory_space<vmem>>, %arg5: memref<1x10x128xf32, #tpu.memory_space<vmem>>, %arg6: memref<1x10x128xf32, #tpu.memory_space<vmem>>, %arg7: memref<1x1x2x128xf32, #tpu.memory_space<vmem>>, %arg8: memref<1x128xf32, #tpu.memory_space<vmem>>, %arg9: memref<1x128xf32, #tpu.memory_space<vmem>>) attributes {dimension_semantics = [#tpu.dimension_semantics<parallel>, #tpu.dimension_semantics<parallel>, #tpu.dimension_semantics<arbitrary>], iteration_bounds = array<i64: 1, 2, 1>, scalar_prefetch = 1 : i64, scratch_operands = 2 : i64, tpu.core_type = #tpu.core_type<tc>, window_params = [{transform_indices = @transform_0, window_bounds = array<i64: 1, 10, 128>}, {transform_indices = @transform_1, window_bounds = array<i64: 1, 10, 128>}, {transform_indices = @transform_2, window_bounds = array<i64: 1, 10, 128>}, {transform_indices = @transform_3, window_bounds = array<i64: 1, 1, 2, 128>}]} {
    %c0_i32 = arith.constant 0 : i32
    %0 = arith.cmpi eq, %arg2, %c0_i32 : i32
    %1 = arith.extui %0 : i1 to i32
    %c0_i32_0 = arith.constant 0 : i32
    %2 = arith.cmpi ne, %1, %c0_i32_0 : i32
    scf.if %2 {
      %cst_22 = arith.constant 0.000000e+00 : f32
      %44 = vector.broadcast %cst_22 : f32 to vector<1x128xf32>
      %c0_23 = arith.constant 0 : index
      %c0_24 = arith.constant 0 : index
      %45 = vector.load %arg8[%c0_23, %c0_24] : memref<1x128xf32, #tpu.memory_space<vmem>>, vector<1x128xf32>
      tpu.vector_store %arg8[%c0_23, %c0_24], %44 {strides = array<i32>} : memref<1x128xf32, #tpu.memory_space<vmem>>, vector<1x128xf32>,
      %cst_25 = arith.constant 0.000000e+00 : f32
      %46 = vector.broadcast %cst_25 : f32 to vector<1x128xf32>
      %c0_26 = arith.constant 0 : index
      %c0_27 = arith.constant 0 : index
      %47 = vector.load %arg9[%c0_26, %c0_27] : memref<1x128xf32, #tpu.memory_space<vmem>>, vector<1x128xf32>
      tpu.vector_store %arg9[%c0_26, %c0_27], %46 {strides = array<i32>} : memref<1x128xf32, #tpu.memory_space<vmem>>, vector<1x128xf32>,
    } else {
    }
    %c0 = arith.constant 0 : index
    %c0_1 = arith.constant 0 : index
    %c0_2 = arith.constant 0 : index
    %3 = vector.load %arg6[%c0, %c0_1, %c0_2] : memref<1x10x128xf32, #tpu.memory_space<vmem>>, vector<1x10x128xf32>
    %c0_3 = arith.constant 0 : index
    %c0_4 = arith.constant 0 : index
    %c0_5 = arith.constant 0 : index
    %4 = vector.load %arg4[%c0_3, %c0_4, %c0_5] : memref<1x10x128xf32, #tpu.memory_space<vmem>>, vector<1x10x128xf32>
    %c0_6 = arith.constant 0 : index
    %c0_7 = arith.constant 0 : index
    %c0_8 = arith.constant 0 : index
    %5 = vector.load %arg5[%c0_6, %c0_7, %c0_8] : memref<1x10x128xf32, #tpu.memory_space<vmem>>, vector<1x10x128xf32>
    %c1_i32 = arith.constant 1 : i32
    %6 = arith.muli %arg0, %c1_i32 : i32
    %7 = arith.addi %6, %arg2 : i32
    %8 = tpu.iota {dimensions = array<i32: 1>} : vector<1x10x128xi32>
    %9 = tpu.iota {dimensions = array<i32: 2>} : vector<1x10x128xi32>
    %c10_i32 = arith.constant 10 : i32
    %10 = arith.muli %7, %c10_i32 : i32
    %11 = vector.broadcast %10 : i32 to vector<1x10x128xi32>
    %12 = arith.addi %11, %8 : vector<1x10x128xi32>
    %c128_i32 = arith.constant 128 : i32
    %13 = vector.broadcast %c128_i32 : i32 to vector<1x10x128xi32>
    %14 = arith.muli %12, %13 : vector<1x10x128xi32>
    %15 = arith.addi %14, %9 : vector<1x10x128xi32>
    %16 = arith.index_cast %arg1 : i32 to index
    %17 = memref.load %arg3[%16] : memref<2xi32, #tpu.memory_space<smem>>
    %c80_i32 = arith.constant 80 : i32
    %18 = arith.muli %17, %c80_i32 : i32
    %19 = vector.broadcast %18 : i32 to vector<1x10x128xi32>
    %20 = arith.cmpi slt, %15, %19 : vector<1x10x128xi32>
    %21 = arith.subf %4, %3 : vector<1x10x128xf32>
    %cst = arith.constant 0.000000e+00 : f32
    %22 = vector.broadcast %cst : f32 to vector<1x10x128xf32>
    %23 = arith.select %20, %21, %22 : vector<1x10x128xi1>, vector<1x10x128xf32>
    %24 = arith.subf %5, %3 : vector<1x10x128xf32>
    %cst_9 = arith.constant 0.000000e+00 : f32
    %25 = vector.broadcast %cst_9 : f32 to vector<1x10x128xf32>
    %26 = arith.select %20, %24, %25 : vector<1x10x128xi1>, vector<1x10x128xf32>
    %c0_10 = arith.constant 0 : index
    %c0_11 = arith.constant 0 : index
    %27 = vector.load %arg8[%c0_10, %c0_11] : memref<1x128xf32, #tpu.memory_space<vmem>>, vector<1x128xf32>
    %28 = math.absf %23 : vector<1x10x128xf32>
    %29 = math.absf %26 : vector<1x10x128xf32>
    %30 = arith.addf %28, %29 : vector<1x10x128xf32>
    %cst_12 = arith.constant dense<0.000000e+00> : vector<1x128xf32>
    %31 = vector.multi_reduction <add>, %30, %cst_12 [1] : vector<1x10x128xf32> to vector<1x128xf32>
    %32 = arith.addf %27, %31 : vector<1x128xf32>
    %c0_13 = arith.constant 0 : index
    %c0_14 = arith.constant 0 : index
    %33 = vector.load %arg8[%c0_13, %c0_14] : memref<1x128xf32, #tpu.memory_space<vmem>>, vector<1x128xf32>
    tpu.vector_store %arg8[%c0_13, %c0_14], %32 {strides = array<i32>} : memref<1x128xf32, #tpu.memory_space<vmem>>, vector<1x128xf32>,
    %c0_15 = arith.constant 0 : index
    %c0_16 = arith.constant 0 : index
    %34 = vector.load %arg9[%c0_15, %c0_16] : memref<1x128xf32, #tpu.memory_space<vmem>>, vector<1x128xf32>
    %35 = arith.mulf %23, %23 : vector<1x10x128xf32>
    %36 = arith.mulf %26, %26 : vector<1x10x128xf32>
    %37 = arith.addf %35, %36 : vector<1x10x128xf32>
    %cst_17 = arith.constant dense<0.000000e+00> : vector<1x128xf32>
    %38 = vector.multi_reduction <add>, %37, %cst_17 [1] : vector<1x10x128xf32> to vector<1x128xf32>
    %39 = arith.addf %34, %38 : vector<1x128xf32>
    %c0_18 = arith.constant 0 : index
    %c0_19 = arith.constant 0 : index
    %40 = vector.load %arg9[%c0_18, %c0_19] : memref<1x128xf32, #tpu.memory_space<vmem>>, vector<1x128xf32>
    tpu.vector_store %arg9[%c0_18, %c0_19], %39 {strides = array<i32>} : memref<1x128xf32, #tpu.memory_space<vmem>>, vector<1x128xf32>,
    %c0_i32_20 = arith.constant 0 : i32
    %41 = arith.cmpi eq, %arg2, %c0_i32_20 : i32
    %42 = arith.extui %41 : i1 to i32
    %c0_i32_21 = arith.constant 0 : i32
    %43 = arith.cmpi ne, %42, %c0_i32_21 : i32
    scf.if %43 {
      %c0_22 = arith.constant 0 : index
      %c0_23 = arith.constant 0 : index
      %44 = vector.load %arg8[%c0_22, %c0_23] : memref<1x128xf32, #tpu.memory_space<vmem>>, vector<1x128xf32>
      %c0_24 = arith.constant 0 : index
      %c0_25 = arith.constant 0 : index
      %45 = vector.load %arg9[%c0_24, %c0_25] : memref<1x128xf32, #tpu.memory_space<vmem>>, vector<1x128xf32>
      %46 = tpu.concatenate %44, %45 in 0 : vector<1x128xf32>, vector<1x128xf32> -> vector<2x128xf32>
      %47 = vector.shape_cast %46 : vector<2x128xf32> to vector<1x1x2x128xf32>
      %c0_26 = arith.constant 0 : index
      %c0_27 = arith.constant 0 : index
      %c0_28 = arith.constant 0 : index
      %c0_29 = arith.constant 0 : index
      %48 = vector.load %arg7[%c0_26, %c0_27, %c0_28, %c0_29] : memref<1x1x2x128xf32, #tpu.memory_space<vmem>>, vector<1x1x2x128xf32>
      tpu.vector_store %arg7[%c0_26, %c0_27, %c0_28, %c0_29], %47 {strides = array<i32>} : memref<1x1x2x128xf32, #tpu.memory_space<vmem>>, vector<1x1x2x128xf32>,
    } else {
    }
    return
  }
  func.func @transform_0(%arg0: i32, %arg1: i32, %arg2: i32, %arg3: memref<2xi32, #tpu.memory_space<smem>>) -> (i32, i32, i32) {
    %c1_i32 = arith.constant 1 : i32
    %0 = arith.muli %arg0, %c1_i32 : i32
    %1 = arith.addi %0, %arg2 : i32
    %c0_i32 = arith.constant 0 : i32
    %2 = arith.minsi %1, %c0_i32 : i32
    %c0_i32_0 = arith.constant 0 : i32
    %c0_i32_1 = arith.constant 0 : i32
    return %arg1, %2, %c0_i32_0 : i32, i32, i32
  }
  func.func @transform_1(%arg0: i32, %arg1: i32, %arg2: i32, %arg3: memref<2xi32, #tpu.memory_space<smem>>) -> (i32, i32, i32) {
    %c1_i32 = arith.constant 1 : i32
    %0 = arith.muli %arg0, %c1_i32 : i32
    %1 = arith.addi %0, %arg2 : i32
    %c0_i32 = arith.constant 0 : i32
    %2 = arith.minsi %1, %c0_i32 : i32
    %c0_i32_0 = arith.constant 0 : i32
    %c0_i32_1 = arith.constant 0 : i32
    return %arg1, %2, %c0_i32_0 : i32, i32, i32
  }
  func.func @transform_2(%arg0: i32, %arg1: i32, %arg2: i32, %arg3: memref<2xi32, #tpu.memory_space<smem>>) -> (i32, i32, i32) {
    %c1_i32 = arith.constant 1 : i32
    %0 = arith.muli %arg0, %c1_i32 : i32
    %1 = arith.addi %0, %arg2 : i32
    %c0_i32 = arith.constant 0 : i32
    %2 = arith.minsi %1, %c0_i32 : i32
    %c0_i32_0 = arith.constant 0 : i32
    %c0_i32_1 = arith.constant 0 : i32
    return %arg1, %2, %c0_i32_0 : i32, i32, i32
  }
  func.func @transform_3(%arg0: i32, %arg1: i32, %arg2: i32, %arg3: memref<2xi32, #tpu.memory_space<smem>>) -> (i32, i32, i32, i32) {
    %c0_i32 = arith.constant 0 : i32
    %c0_i32_0 = arith.constant 0 : i32
    %c0_i32_1 = arith.constant 0 : i32
    return %arg0, %arg1, %c0_i32, %c0_i32_0 : i32, i32, i32, i32
  }
}

</mosaic_0001>

<llo_original>
// kernel: tpu_custom_call.1
$region0: #{tpu_custom_call.1}
  #allocation0 [shape = 'u32[]', space=smem, size = 0x4, offset = 0x4, fixed_abs, tag = 'smem constant byte address 0x4 - core index']
  #allocation1 [shape = 'u32[144,128]{1,0:T(1,128)}', space=vmem, size = 0x12000, scoped, tag = 'internal scratch']
  #allocation2 [shape = 'f32[1,128]{1,0:T(1,128)}', space=vmem, size = 0x200, scoped, tag = 'scratch operand']
  #allocation3 [shape = 'f32[1,128]{1,0:T(1,128)}', space=vmem, size = 0x200, scoped, tag = 'scratch operand']
  #allocation4 [shape = 's32[1]{0}', space=sflag, size = 0x4, scoped, tag = 'scoped memory for tpu_custom_call.1']
  #allocation5 [shape = 'u8[512]{0}', space=smem, size = 0x200, scoped, tag = 'prefetched SMEM operand 0']
  %s0 = inlined_call_operand.vmem [shape: s32[2], index: 0, kind: input, shape index: {}]
  %s1 = inlined_call_operand.vmem [shape: f32[2,10,128], index: 1, kind: input, shape index: {}]
  %s2 = inlined_call_operand.vmem [shape: f32[2,10,128], index: 2, kind: input, shape index: {}]
  %s3 = inlined_call_operand.vmem [shape: f32[2,10,128], index: 3, kind: input, shape index: {}]
  %s4 = inlined_call_operand.hbm [shape: f32[1,2,2,128], index: 4, kind: output, shape index: {}]
  %s5 = sld [smem:[#allocation0]]
  $region53: #{tpu_custom_call.1} parent=0
    _
  %s7 = ssub.s32 1, %s5
  %s8 = scalar_select 0, %s7, %s5
  %s9 = sshll.u32 %s0, 4
  %s10 = int_to_ptr.vmem [resolvable:$true] %s9
  %12 = dma.vmem_to_smem %s10, 16, [#allocation5], [#allocation4]
  %13 = dma.done [#allocation4], 16
  %14 = sfence
  $region1: #{tpu_custom_call.1} parent=0
    #allocation6 [shape = 'u8[2048]{0}', space=vmem, size = 0x800, scoped, tag = 'output window, operand 0']
    #allocation7 [shape = 's32[2]{0}', space=sflag, size = 0x8, scoped, tag = 'scoped memory for tpu_custom_call.1']
    %15 = vsyncpa [#allocation7], 0
    %s16 = scalar_lea.sflag [#allocation7], 1
    %17 = vsyncpa %s16, 0
    loop: start=0, step=1, limit=4
    $region2: #{tpu_custom_call.1} parent=1 // loop_pre_header
      _
    $region3: #{tpu_custom_call.1} parent=1 // loop_header
      %s19 = sphi 0, %s23
      %p20 = scmp.ge.s32.totalorder %s19, 4
      %s26 = sphi 0, %s45
      %s27 = sphi 0, %s41
      %s28 = sphi 0, %s37
      %s29 = sphi 0, %s26
      %s30 = sphi 0, %s27
      %s31 = sphi 0, %s28
      %s32 = sphi 0, %s29
      %s33 = sphi 0, %s30
      %s34 = sphi 0, %s31
      %s56 = sphi 0, %s58
      %s59 = sphi 0, %s56
      %s60 = sphi 0, %s59
      %s76 = sphi 0, %s60
      %s90 = sphi 0, %s92
      %s93 = sphi 0, %s90
      %s94 = sphi 0, %s93
      %s110 = sphi 0, %s94
      %s124 = sphi 0, %s126
      %s127 = sphi 0, %s124
      %s128 = sphi 0, %s127
      %s144 = sphi 0, %s128
      %s152 = sphi 0, %s154
      %s155 = sphi 0, %s152
      %s156 = sphi 0, %s155
      %s172 = sphi 0, %s156
    $region4: #{tpu_custom_call.1} parent=1 // loop_header_branch
      %22 = sbr.rel (%p20) target = $region8
    $region5: #{tpu_custom_call.1} parent=1 // loop_body
      %s24 = ssub.s32 %s19, 1
      %s25 = ssub.s32 %s19, 2
      %s35 = sadd.s32 1, %s28
      %p36 = scmp.ge.s32.totalorder %s35, 1
      %s37 = scalar_select %p36, 0, %s35
      %s38 = sadd.s32 1, %s27
      %s39 = scalar_select %p36, %s38, %s27
      %p40 = scmp.ge.s32.totalorder %s39, 2
      %s41 = scalar_select %p40, 0, %s39
      %s42 = sadd.s32 1, %s26
      %s43 = scalar_select %p40, %s42, %s26
      %p44 = scmp.ge.s32.totalorder %s43, 1
      %s45 = scalar_select %p44, 0, %s43
      %s46 = sadd.s32 %s26, %s28
      %p47 = scmp.lt.s32.totalorder %s46, 0
      %s48 = scalar_select %p47, %s46, 0
      %s49 = sadd.s32 %s45, %s37
      %p50 = scmp.lt.s32.totalorder %s49, 0
      %s51 = scalar_select %p50, %s49, 0
      %s52 = ssub.s32 %s27, %s41
      %s53 = ssub.s32 %s48, %s51
      %s54 = sor.u32 %s52, %s53
      %p55 = scmp.eq.s32.totalorder %s54, 0
      %s57 = sadd.s32 %s56, 1
      %s58 = scalar_select %p55, %s56, %s57
      %p61 = pneg %p55
      %p62 = scmp.eq.s32.totalorder %s19, 1
      %p63 = por %p61, %p62
      %p64 = scmp.ne.s32.totalorder %s56, %s59
      %p65 = scmp.eq.s32.totalorder %s19, 0
      %p66 = por %p64, %p65
      %p67 = scmp.ne.s32.totalorder %s56, %s59
      %p68 = scmp.eq.s32.totalorder %s24, 1
      %p69 = por %p67, %p68
      %p70 = scmp.ne.s32.totalorder %s59, %s60
      %p71 = scmp.eq.s32.totalorder %s24, 0
      %p72 = por %p70, %p71
      %p73 = scmp.ne.s32.totalorder %s59, %s60
      %p74 = scmp.eq.s32.totalorder %s25, 1
      %p75 = por %p73, %p74
      %p77 = scmp.ne.s32.totalorder %s60, %s76
      %p78 = scmp.eq.s32.totalorder %s25, 0
      %p79 = por %p77, %p78
      %s80 = sadd.s32 %s26, %s28
      %p81 = scmp.lt.s32.totalorder %s80, 0
      %s82 = scalar_select %p81, %s80, 0
      %s83 = sadd.s32 %s45, %s37
      %p84 = scmp.lt.s32.totalorder %s83, 0
      %s85 = scalar_select %p84, %s83, 0
      %s86 = ssub.s32 %s27, %s41
      %s87 = ssub.s32 %s82, %s85
      %s88 = sor.u32 %s86, %s87
      %p89 = scmp.eq.s32.totalorder %s88, 0
      %s91 = sadd.s32 %s90, 1
      %s92 = scalar_select %p89, %s90, %s91
      %p95 = pneg %p89
      %p96 = scmp.eq.s32.totalorder %s19, 1
      %p97 = por %p95, %p96
      %p98 = scmp.ne.s32.totalorder %s90, %s93
      %p99 = scmp.eq.s32.totalorder %s19, 0
      %p100 = por %p98, %p99
      %p101 = scmp.ne.s32.totalorder %s90, %s93
      %p102 = scmp.eq.s32.totalorder %s24, 1
      %p103 = por %p101, %p102
      %p104 = scmp.ne.s32.totalorder %s93, %s94
      %p105 = scmp.eq.s32.totalorder %s24, 0
      %p106 = por %p104, %p105
      %p107 = scmp.ne.s32.totalorder %s93, %s94
      %p108 = scmp.eq.s32.totalorder %s25, 1
      %p109 = por %p107, %p108
      %p111 = scmp.ne.s32.totalorder %s94, %s110
      %p112 = scmp.eq.s32.totalorder %s25, 0
      %p113 = por %p111, %p112
      %s114 = sadd.s32 %s26, %s28
      %p115 = scmp.lt.s32.totalorder %s114, 0
      %s116 = scalar_select %p115, %s114, 0
      %s117 = sadd.s32 %s45, %s37
      %p118 = scmp.lt.s32.totalorder %s117, 0
      %s119 = scalar_select %p118, %s117, 0
      %s120 = ssub.s32 %s27, %s41
      %s121 = ssub.s32 %s116, %s119
      %s122 = sor.u32 %s120, %s121
      %p123 = scmp.eq.s32.totalorder %s122, 0
      %s125 = sadd.s32 %s124, 1
      %s126 = scalar_select %p123, %s124, %s125
      %p129 = pneg %p123
      %p130 = scmp.eq.s32.totalorder %s19, 1
      %p131 = por %p129, %p130
      %p132 = scmp.ne.s32.totalorder %s124, %s127
      %p133 = scmp.eq.s32.totalorder %s19, 0
      %p134 = por %p132, %p133
      %p135 = scmp.ne.s32.totalorder %s124, %s127
      %p136 = scmp.eq.s32.totalorder %s24, 1
      %p137 = por %p135, %p136
      %p138 = scmp.ne.s32.totalorder %s127, %s128
      %p139 = scmp.eq.s32.totalorder %s24, 0
      %p140 = por %p138, %p139
      %p141 = scmp.ne.s32.totalorder %s127, %s128
      %p142 = scmp.eq.s32.totalorder %s25, 1
      %p143 = por %p141, %p142
      %p145 = scmp.ne.s32.totalorder %s128, %s144
      %p146 = scmp.eq.s32.totalorder %s25, 0
      %p147 = por %p145, %p146
      %s148 = ssub.s32 %s26, %s45
      %s149 = ssub.s32 %s27, %s41
      %s150 = sor.u32 %s148, %s149
      %p151 = scmp.eq.s32.totalorder %s150, 0
      %s153 = sadd.s32 %s152, 1
      %s154 = scalar_select %p151, %s152, %s153
      %p157 = pneg %p151
      %p158 = scmp.eq.s32.totalorder %s19, 1
      %p159 = por %p157, %p158
      %p160 = scmp.ne.s32.totalorder %s152, %s155
      %p161 = scmp.eq.s32.totalorder %s19, 0
      %p162 = por %p160, %p161
      %p163 = scmp.ne.s32.totalorder %s152, %s155
      %p164 = scmp.eq.s32.totalorder %s24, 1
      %p165 = por %p163, %p164
      %p166 = scmp.ne.s32.totalorder %s155, %s156
      %p167 = scmp.eq.s32.totalorder %s24, 0
      %p168 = por %p166, %p167
      %p169 = scmp.ne.s32.totalorder %s155, %s156
      %p170 = scmp.eq.s32.totalorder %s25, 1
      %p171 = por %p169, %p170
      %p173 = scmp.ne.s32.totalorder %s156, %s172
      %p174 = scmp.eq.s32.totalorder %s25, 0
      %p175 = por %p173, %p174
      %p176 = scmp.le.s32.totalorder 1, %s19
      %p177 = scmp.lt.s32.totalorder %s19, 3
      %p178 = pnand %p176, %p177
      %p179 = pneg %p178
      // Predicated region
      $region9: #{tpu_custom_call.1} parent=5 // pred_check
        _
      $region10: #{tpu_custom_call.1} parent=5 // pred_check_branch
        %181 = sbr.rel (%p178) target = $region12
      $region11: #{tpu_custom_call.1} parent=5 // pred_region
        %s182 = ssub.s32 %s19, 1
      $region12: #{tpu_custom_call.1} parent=5 // pred_fallthru
        _
      %p183 = scmp.lt.s32.totalorder %s19, 2
      // Predicated region
      $region13: #{tpu_custom_call.1} parent=5 // pred_check
        %p184 = pneg %p183
      $region14: #{tpu_custom_call.1} parent=5 // pred_check_branch
        %186 = sbr.rel (%p184) target = $region16
      $region15: #{tpu_custom_call.1} parent=5 // pred_region
        // Predicated region
        $region17: #{tpu_custom_call.1} parent=15 // pred_check
          %p187 = pneg %p66
        $region18: #{tpu_custom_call.1} parent=15 // pred_check_branch
          %189 = sbr.rel (%p187) target = $region20
        $region19: #{tpu_custom_call.1} parent=15 // pred_region
          %s190 = sadd.s32 %s26, %s28
          %p191 = scmp.lt.s32.totalorder %s190, 0
          %s192 = scalar_select %p191, %s190, 0
          %s193 = smul.u32 2, %s192
          %p194 = scmp.lt.s32.totalorder %s27, 1
          %s195 = scalar_select %p194, %s27, 1
          %p196 = scmp.lt.s32.totalorder %s193, 1
          %s197 = scalar_select %p196, %s193, 1
          %s198 = smul.addr %s195, 2
          %s199 = sadd.s32 %s197, %s198
          %s200 = smul.addr %s199, 8
          %s201 = scalar_lea.vmem %s1, %s200
          %s202 = sadd.s32 %s26, %s28
          %p203 = scmp.lt.s32.totalorder %s202, 0
          %s204 = scalar_select %p203, %s202, 0
          %s205 = smul.u32 2, %s204
        $region20: #{tpu_custom_call.1} parent=15 // pred_fallthru
          _
        // Predicated region
        $region21: #{tpu_custom_call.1} parent=15 // pred_check
          %p206 = pneg %p100
        $region22: #{tpu_custom_call.1} parent=15 // pred_check_branch
          %208 = sbr.rel (%p206) target = $region24
        $region23: #{tpu_custom_call.1} parent=15 // pred_region
          %s209 = sadd.s32 %s26, %s28
          %p210 = scmp.lt.s32.totalorder %s209, 0
          %s211 = scalar_select %p210, %s209, 0
          %s212 = smul.u32 2, %s211
          %p213 = scmp.lt.s32.totalorder %s27, 1
          %s214 = scalar_select %p213, %s27, 1
          %p215 = scmp.lt.s32.totalorder %s212, 1
          %s216 = scalar_select %p215, %s212, 1
          %s217 = smul.addr %s214, 2
          %s218 = sadd.s32 %s216, %s217
          %s219 = smul.addr %s218, 8
          %s220 = scalar_lea.vmem %s2, %s219
          %s221 = sadd.s32 %s26, %s28
          %p222 = scmp.lt.s32.totalorder %s221, 0
          %s223 = scalar_select %p222, %s221, 0
          %s224 = smul.u32 2, %s223
        $region24: #{tpu_custom_call.1} parent=15 // pred_fallthru
          _
        // Predicated region
        $region25: #{tpu_custom_call.1} parent=15 // pred_check
          %p225 = pneg %p134
        $region26: #{tpu_custom_call.1} parent=15 // pred_check_branch
          %227 = sbr.rel (%p225) target = $region28
        $region27: #{tpu_custom_call.1} parent=15 // pred_region
          %s228 = sadd.s32 %s26, %s28
          %p229 = scmp.lt.s32.totalorder %s228, 0
          %s230 = scalar_select %p229, %s228, 0
          %s231 = smul.u32 2, %s230
          %p232 = scmp.lt.s32.totalorder %s27, 1
          %s233 = scalar_select %p232, %s27, 1
          %p234 = scmp.lt.s32.totalorder %s231, 1
          %s235 = scalar_select %p234, %s231, 1
          %s236 = smul.addr %s233, 2
          %s237 = sadd.s32 %s235, %s236
          %s238 = smul.addr %s237, 8
          %s239 = scalar_lea.vmem %s3, %s238
          %s240 = sadd.s32 %s26, %s28
          %p241 = scmp.lt.s32.totalorder %s240, 0
          %s242 = scalar_select %p241, %s240, 0
          %s243 = smul.u32 2, %s242
        $region28: #{tpu_custom_call.1} parent=15 // pred_fallthru
          _
      $region16: #{tpu_custom_call.1} parent=5 // pred_fallthru
        _
      %p244 = scmp.le.s32.totalorder 1, %s19
      %p245 = scmp.lt.s32.totalorder %s19, 3
      %p246 = pnand %p244, %p245
      %p247 = pneg %p246
      // Predicated region
      $region29: #{tpu_custom_call.1} parent=5 // pred_check
        _
      $region30: #{tpu_custom_call.1} parent=5 // pred_check_branch
        %249 = sbr.rel (%p246) target = $region32
      $region31: #{tpu_custom_call.1} parent=5 // pred_region
        %s250 = ssub.s32 %s19, 1
        %s251 = sadd.s32 %s29, %s31
        %p252 = scmp.lt.s32.totalorder %s251, 0
        %s253 = scalar_select %p252, %s251, 0
        %s254 = smul.u32 2, %s253
        %p255 = scmp.lt.s32.totalorder %s30, 1
        %s256 = scalar_select %p255, %s30, 1
        %p257 = scmp.lt.s32.totalorder %s254, 1
        %s258 = scalar_select %p257, %s254, 1
        %s259 = smul.addr %s256, 2
        %s260 = sadd.s32 %s258, %s259
        %s261 = smul.addr %s260, 8
        %s262 = scalar_lea.vmem %s1, %s261
        %p263 = pneg %p72
        %p264 = pneg %p69
        %s265 = sadd.s32 %s29, %s31
        %p266 = scmp.lt.s32.totalorder %s265, 0
        %s267 = scalar_select %p266, %s265, 0
        %s268 = smul.u32 2, %s267
        %p269 = scmp.lt.s32.totalorder %s30, 1
        %s270 = scalar_select %p269, %s30, 1
        %p271 = scmp.lt.s32.totalorder %s268, 1
        %s272 = scalar_select %p271, %s268, 1
        %s273 = smul.addr %s270, 2
        %s274 = sadd.s32 %s272, %s273
        %s275 = smul.addr %s274, 8
        %s276 = scalar_lea.vmem %s2, %s275
        %p277 = pneg %p106
        %p278 = pneg %p103
        %s279 = sadd.s32 %s29, %s31
        %p280 = scmp.lt.s32.totalorder %s279, 0
        %s281 = scalar_select %p280, %s279, 0
        %s282 = smul.u32 2, %s281
        %p283 = scmp.lt.s32.totalorder %s30, 1
        %s284 = scalar_select %p283, %s30, 1
        %p285 = scmp.lt.s32.totalorder %s282, 1
        %s286 = scalar_select %p285, %s282, 1
        %s287 = smul.addr %s284, 2
        %s288 = sadd.s32 %s286, %s287
        %s289 = smul.addr %s288, 8
        %s290 = scalar_lea.vmem %s3, %s289
        %p291 = pneg %p140
        %p292 = pneg %p137
        %p293 = pneg %p168
        %p294 = pneg %p165
        %s295 = sand.u32 %s155, 1
        %s296 = scalar_lea.sflag [#allocation7], %s295
        %s297 = sand.u32 %s155, 1
        %s298 = smul.addr %s297, 2
        %s299 = scalar_lea.vmem [#allocation6], %s298
        %s300 = sadd.s32 %s29, %s31
        %p301 = scmp.lt.s32.totalorder %s300, 0
        %s302 = scalar_select %p301, %s300, 0
        %s303 = smul.u32 2, %s302
        %p304 = scmp.lt.s32.totalorder %s30, 1
        %s305 = scalar_select %p304, %s30, 1
        %p306 = scmp.lt.s32.totalorder %s303, 1
        %s307 = scalar_select %p306, %s303, 1
        %s308 = smul.addr %s305, 2
        %s309 = sadd.s32 %s307, %s308
        %s310 = smul.addr %s309, 8
        %s311 = scalar_lea.vmem %s1, %s310
        %s312 = sadd.s32 %s29, %s31
        %p313 = scmp.lt.s32.totalorder %s312, 0
        %s314 = scalar_select %p313, %s312, 0
        %s315 = smul.u32 2, %s314
        %s316 = sadd.s32 %s29, %s31
        %p317 = scmp.lt.s32.totalorder %s316, 0
        %s318 = scalar_select %p317, %s316, 0
        %s319 = smul.u32 2, %s318
        %p320 = scmp.lt.s32.totalorder %s30, 1
        %s321 = scalar_select %p320, %s30, 1
        %p322 = scmp.lt.s32.totalorder %s319, 1
        %s323 = scalar_select %p322, %s319, 1
        %s324 = smul.addr %s321, 2
        %s325 = sadd.s32 %s323, %s324
        %s326 = smul.addr %s325, 8
        %s327 = scalar_lea.vmem %s2, %s326
        %s328 = sadd.s32 %s29, %s31
        %p329 = scmp.lt.s32.totalorder %s328, 0
        %s330 = scalar_select %p329, %s328, 0
        %s331 = smul.u32 2, %s330
        %s332 = sadd.s32 %s29, %s31
        %p333 = scmp.lt.s32.totalorder %s332, 0
        %s334 = scalar_select %p333, %s332, 0
        %s335 = smul.u32 2, %s334
        %p336 = scmp.lt.s32.totalorder %s30, 1
        %s337 = scalar_select %p336, %s30, 1
        %p338 = scmp.lt.s32.totalorder %s335, 1
        %s339 = scalar_select %p338, %s335, 1
        %s340 = smul.addr %s337, 2
        %s341 = sadd.s32 %s339, %s340
        %s342 = smul.addr %s341, 8
        %s343 = scalar_lea.vmem %s3, %s342
        %s344 = sadd.s32 %s29, %s31
        %p345 = scmp.lt.s32.totalorder %s344, 0
        %s346 = scalar_select %p345, %s344, 0
        %s347 = smul.u32 2, %s346
        %p348 = scmp.eq.s32.totalorder %s31, 0
        // Predicated region
        $region33: #{tpu_custom_call.1} parent=31 // pred_check
          %p349 = pneg %p348
        $region34: #{tpu_custom_call.1} parent=31 // pred_check_branch
          %351 = sbr.rel (%p349) target = $region36
        $region35: #{tpu_custom_call.1} parent=31 // pred_region
          %352 = vst [vmem:[#allocation2] sm:$0x1] 0.0
          %353 = vst [vmem:[#allocation3] sm:$0x1] 0.0
        $region36: #{tpu_custom_call.1} parent=31 // pred_fallthru
          _
        %v354 = vld [vmem:[%s343] sm:$0xff]
        %v355 = vld [vmem:[%s343 + $0x8] sm:$0x3]
        %v356 = vld [vmem:[%s311] sm:$0xff]
        %v357 = vld [vmem:[%s311 + $0x8] sm:$0x3]
        %v358 = vld [vmem:[%s327] sm:$0xff]
        %v359 = vld [vmem:[%s327 + $0x8] sm:$0x3]
        %s360 = sadd.s32 %s29, %s31
        %v361 = vlaneseq
        %v362 = vshrl.u32 %v361, 7
        %v363 = vadd.s32 %v362, 8
        %v364 = vlaneseq
        %v365 = vand.u32 %v364, 127
        %s366 = smul.u32 %s360, 10
        %v367 = vstv %s366
        %v368 = vadd.s32 %v367, %v362
        %v369 = vadd.s32 %v367, %v363
        %v370 = vmul.u32 %v368, 128
        %v371 = vmul.u32 %v369, 128
        %v372 = vadd.s32 %v370, %v365
        %v373 = vadd.s32 %v371, %v365
        %s374 = sld [smem:[#allocation5 + %s30]]
        %s375 = smul.u32 %s374, 80
        %v376 = vstv %s375
        %vm377 = vcmp.lt.s32.totalorder %v372, %v376
        %vm378 = vcmp.lt.s32.totalorder %v373, %v376
        %v379 = vsub.f32 %v356, %v354
        %v380 = vsub.f32 %v357, %v355
        %v381 = vsel %vm377, %v379, 0.0
        %v382 = vsel %vm378, %v380, 0.0
        %v383 = vsub.f32 %v358, %v354
        %v384 = vsub.f32 %v359, %v355
        %v385 = vsel %vm377, %v383, 0.0
        %v386 = vsel %vm378, %v384, 0.0
        %v387 = vld [vmem:[#allocation2] sm:$0x1]
        %v388 = vand.u32 2147483647, %v381
        %v389 = vand.u32 2147483647, %v382
        %v390 = vand.u32 2147483647, %v385
        %v391 = vand.u32 2147483647, %v386
        %v392 = vadd.f32 %v388, %v390
        %v393 = vadd.f32 %v389, %v391
        %vm394 = vcmask 1041408
        %v395 = vsel %vm394, %v393, 0.0
        %v396 = vadd.f32 %v392, %v395
        %v397 = vrot.slane %v396, 4
        %v398 = vadd.f32 %v396, %v397
        %v399 = vrot.slane %v398, 2
        %v400 = vadd.f32 %v398, %v399
        %v401 = vrot.slane %v400, 1
        %v402 = vadd.f32 %v400, %v401
        %v403 = vadd.f32 %v387, %v402
        %404 = vst [vmem:[#allocation2] sm:$0x1] %v403
        %v405 = vld [vmem:[#allocation3] sm:$0x1]
        %v406 = vmul.f32 %v381, %v381
        %v407 = vmul.f32 %v382, %v382
        %v408 = vmul.f32 %v385, %v385
        %v409 = vmul.f32 %v386, %v386
        %v410 = vadd.f32 %v406, %v408
        %v411 = vadd.f32 %v407, %v409
        %v412 = vsel %vm394, %v411, 0.0
        %v413 = vadd.f32 %v410, %v412
        %v414 = vrot.slane %v413, 4
        %v415 = vadd.f32 %v413, %v414
        %v416 = vrot.slane %v415, 2
        %v417 = vadd.f32 %v415, %v416
        %v418 = vrot.slane %v417, 1
        %v419 = vadd.f32 %v417, %v418
        %v420 = vadd.f32 %v405, %v419
        %421 = vst [vmem:[#allocation3] sm:$0x1] %v420
        // Predicated region
        $region37: #{tpu_custom_call.1} parent=31 // pred_check
          %p422 = pneg %p348
        $region38: #{tpu_custom_call.1} parent=31 // pred_check_branch
          %424 = sbr.rel (%p422) target = $region40
        $region39: #{tpu_custom_call.1} parent=31 // pred_region
          %v425 = vld [vmem:[#allocation2] sm:$0x1]
          %v426 = vld [vmem:[#allocation3] sm:$0x1]
          %v428 = vlaneseq
          %v429 = vshrl.u32 %v428, 7
          %v430 = vsub.s32 0, %v429
          %v431 = vrot.slane %v426, %v430
          %vm433 = vcmask 1040384
          %v434 = vsel %vm433, %v425, %v431
          %435 = vst [vmem:[%s299] sm:$0x3] %v434
        $region40: #{tpu_custom_call.1} parent=31 // pred_fallthru
          _
        %s436 = sand.u32 %s155, 1
        %s437 = scalar_lea.sflag [#allocation7], %s436
        %s438 = sand.u32 %s155, 1
        %s439 = smul.addr %s438, 2
        %s440 = scalar_lea.vmem [#allocation6], %s439
        // Predicated region
        $region41: #{tpu_custom_call.1} parent=31 // pred_check
          %p441 = pneg %p165
        $region42: #{tpu_custom_call.1} parent=31 // pred_check_branch
          %443 = sbr.rel (%p441) target = $region44
        $region43: #{tpu_custom_call.1} parent=31 // pred_region
          %s445 = ssub.s32 32, 32
          %446 = vsyncadd %s437, %s445
          %s447 = smul.addr %s29, 2
          %s448 = sadd.s32 %s30, %s447
          %s449 = smul.addr %s448, 32
          %s450 = scalar_lea.hbm %s4, %s449
          %s452 = sshll.u32 %s440, 4
          %s453 = int_to_ptr.vmem [resolvable:$true] %s452
          %455 = dma.vmem_to_hbm [thread:$0]  %s453, 32, %s450, %s437
        $region44: #{tpu_custom_call.1} parent=31 // pred_fallthru
          _
      $region32: #{tpu_custom_call.1} parent=5 // pred_fallthru
        _
      %p456 = scmp.le.s32.totalorder 2, %s19
      // Predicated region
      $region45: #{tpu_custom_call.1} parent=5 // pred_check
        %p457 = pneg %p456
      $region46: #{tpu_custom_call.1} parent=5 // pred_check_branch
        %459 = sbr.rel (%p457) target = $region48
      $region47: #{tpu_custom_call.1} parent=5 // pred_region
        %s460 = ssub.s32 %s19, 2
        // Predicated region
        $region49: #{tpu_custom_call.1} parent=47 // pred_check
          %p461 = pneg %p171
        $region50: #{tpu_custom_call.1} parent=47 // pred_check_branch
          %463 = sbr.rel (%p461) target = $region52
        $region51: #{tpu_custom_call.1} parent=47 // pred_region
          %s464 = sand.u32 %s156, 1
          %s465 = scalar_lea.sflag [#allocation7], %s464
          %s466 = sand.u32 %s156, 1
          %s467 = smul.addr %s466, 2
          %s468 = scalar_lea.vmem [#allocation6], %s467
          %469 = dma.done %s465, 32
        $region52: #{tpu_custom_call.1} parent=47 // pred_fallthru
          _
      $region48: #{tpu_custom_call.1} parent=5 // pred_fallthru
        _
    $region6: #{tpu_custom_call.1} parent=1 // loop_footer
      %s23 = sadd.s32 1, %s19
    $region7: #{tpu_custom_call.1} parent=1 // loop_footer_branch
      %18 = sbr.rel target = $region3
    $region8: #{tpu_custom_call.1} parent=1 // loop_exit
      _
    %470 = vsyncpa [#allocation7], 1
    %s471 = scalar_lea.sflag [#allocation7], 1
    %472 = vsyncpa %s471, 1

</llo_original>
